<compile_context>
chip_gen: v5e
topology: v5e:2x2
jax: 0.10.0
libtpu: 0.0.40
codegen_flags: <defaults>
</compile_context>

<pallas_src>
import functools

import jax
import jax.numpy as jnp
from jax.experimental import pallas as pl
from jax.experimental.pallas import tpu as pltpu

LANE = 128      # lane width of a vreg (last dim)
SUBLANE = 8     # sublane count of a vreg (second-to-last dim, f32)


def _round_up(n, m):
    return ((n + m - 1) // m) * m


def default_activation_dtype():
    """bf16 elementwise on chips with a bf16 VPU/EUP (v6e/v7x); f32 otherwise."""
    try:
        kind = jax.devices()[0].device_kind.lower()
    except Exception:
        return jnp.float32
    if ("v6" in kind) or ("v7" in kind) or ("7x" in kind):
        return jnp.bfloat16
    return jnp.float32


def prepare_params(params):
    """One-time layout prep (hoist out of the per-step forward path).

    params : list of (W, b) with W (in, out), b (1, out) or (out,), float.
    Returns list of (W_padded_bf16, b_padded_f32) in the kernel layout:
      * first layer keeps its real input width (small-K dot),
      * last layer keeps its real output width (narrow f32 writeback),
      * all hidden feature dims are zero-padded to multiples of 128 lanes.
    """
    n_layers = len(params)
    prepared = []
    for idx, (w, b) in enumerate(params):
        w = jnp.asarray(w, jnp.float32)
        b = jnp.asarray(b, jnp.float32).reshape(1, -1)
        fi, fo = w.shape
        fi_p = fi if idx == 0 else _round_up(fi, LANE)
        fo_p = fo if idx == n_layers - 1 else _round_up(fo, LANE)
        w_p = jnp.zeros((fi_p, fo_p), jnp.bfloat16).at[:fi, :fo].set(
            w.astype(jnp.bfloat16))
        b_p = jnp.zeros((1, fo_p), jnp.float32).at[:, :fo].set(b)
        prepared.append((w_p, b_p))
    return prepared


def _mlp_kernel(*refs, n_layers, bf16_elementwise):
    """Whole MLP hot path for one batch tile (all layers fused)."""
    x_ref = refs[0]
    o_ref = refs[-1]
    wb_refs = refs[1:-1]

    h = x_ref[...].astype(jnp.bfloat16)          # (tile_b, in_dim) bf16
    for li in range(n_layers - 1):
        w_ref, b_ref = wb_refs[2 * li], wb_refs[2 * li + 1]
        # bf16 operands -> MXU, f32 accumulate.
        y = jnp.dot(h, w_ref[...], preferred_element_type=jnp.float32)
        if bf16_elementwise:
            # bias + SiLU in bf16 (v6e/v7x VPU/EUP have a bf16 path).
            yb = y.astype(jnp.bfloat16) + b_ref[...].astype(jnp.bfloat16)
            h = yb * jax.nn.sigmoid(yb)          # already bf16 for next MXU pass
        else:
            # f32 elementwise path (v5e has no bf16 VALU/EUP).
            yf = y + b_ref[...]
            h = (yf * jax.nn.sigmoid(yf)).astype(jnp.bfloat16)

    w_ref, b_ref = wb_refs[-2], wb_refs[-1]
    y = jnp.dot(h, w_ref[...], preferred_element_type=jnp.float32) + b_ref[...]
    o_ref[...] = y.astype(o_ref.dtype)           # narrow (tile_b, out_dim) f32 store


def net_forward(x, prepared_params, *, tile_b=None, act_dtype=None):
    """Forward pass of `Net`.

    x               : (B, input_dim) float array.
    prepared_params : output of prepare_params().
    Returns (B, output_dim) float32.
    """
    x = jnp.asarray(x, jnp.float32)
    B, in_dim = x.shape
    out_dim = prepared_params[-1][0].shape[1]
    n_layers = len(prepared_params)

    if act_dtype is None:
        act_dtype = default_activation_dtype()
    bf16_elementwise = (act_dtype == jnp.bfloat16)

    # ---- batch tiling: single tile up to 1024 rows, 1024-row tiles above. ----
    if tile_b is None:
        tile_b = _round_up(B, SUBLANE) if B <= 1024 else 1024
    else:
        # Guard caller-supplied tile sizes against the (8,128) tiling rule.
        tile_b = _round_up(max(int(tile_b), 1), 16)
    B_p = _round_up(B, tile_b)
    if B_p != B:
        # Cheap: only pads a few rows of the *narrow* x (no 128-lane inflation).
        x = jnp.pad(x, ((0, B_p - B), (0, 0)))

    # ---- specs ----
    in_specs = [pl.BlockSpec((tile_b, in_dim), lambda i: (i, 0))]
    args = [x]
    for w_p, b_p in prepared_params:
        # Small, fully VMEM-resident, replicated across batch tiles.
        in_specs.append(pl.BlockSpec(w_p.shape, lambda i: (0, 0)))
        in_specs.append(pl.BlockSpec(b_p.shape, lambda i: (0, 0)))
        args.append(w_p)
        args.append(b_p)
    out_specs = pl.BlockSpec((tile_b, out_dim), lambda i: (i, 0))

    # ---- advisory cost estimate for the XLA scheduler ----
    hidden_p = int(prepared_params[0][0].shape[1])
    flops = 2 * B_p * sum(int(w.shape[0]) * int(w.shape[1])
                          for w, _ in prepared_params)
    transcendentals = (n_layers - 1) * B_p * hidden_p   # one sigmoid / hidden unit
    bytes_accessed = (B_p * in_dim * 4
                      + sum(int(w.size) * 2 + int(b.size) * 4
                            for w, b in prepared_params)
                      + B_p * out_dim * 4)
    cost = pl.CostEstimate(flops=int(flops),
                           transcendentals=int(transcendentals),
                           bytes_accessed=int(bytes_accessed))

    # v5e's scoped-VMEM default is only 16 MiB; give headroom for very large
    # caller-supplied batch tiles.  (Default tiles need only a few MiB.)
    vmem_limit = 48 * 1024 * 1024 if tile_b > 2048 else None

    kernel = functools.partial(_mlp_kernel, n_layers=n_layers,
                               bf16_elementwise=bf16_elementwise)

    out = pl.pallas_call(
        kernel,
        out_shape=jax.ShapeDtypeStruct((B_p, out_dim), jnp.float32),
        grid=(B_p // tile_b,),
        in_specs=in_specs,
        out_specs=out_specs,
        compiler_params=pltpu.CompilerParams(
            dimension_semantics=("parallel",),
            vmem_limit_bytes=vmem_limit),
        cost_estimate=cost,
    )(*args)

    if B_p != B:
        out = out[:B]
    return out


def init_params(key, input_dim, n_units, output_dim):
    """Mimics nn.Linear's U(-1/sqrt(fan_in), 1/sqrt(fan_in)) init, stored as (in, out)."""
    dims = [(input_dim, n_units), (n_units, n_units), (n_units, n_units),
            (n_units, n_units), (n_units, output_dim)]
    params = []
    for (fan_in, fan_out) in dims:
        key, kw, kb = jax.random.split(key, 3)
        bound = 1.0 / jnp.sqrt(jnp.float32(fan_in))
        w = jax.random.uniform(kw, (fan_in, fan_out), jnp.float32, -bound, bound)
        b = jax.random.uniform(kb, (1, fan_out), jnp.float32, -bound, bound)
        params.append((w, b))
    return params


def reference_forward(x, params, matmul_dtype=jnp.float32, act_dtype=jnp.float32):
    """Pure-JAX reference; matmul_dtype / act_dtype mirror the kernel's math."""
    h = x.astype(matmul_dtype)
    for (w, b) in params[:-1]:
        y = jnp.dot(h, w.astype(matmul_dtype),
                    preferred_element_type=jnp.float32)
        if act_dtype == jnp.bfloat16:
            y = y.astype(jnp.bfloat16) + b.astype(jnp.bfloat16)
        else:
            y = y.astype(jnp.float32) + b
        y = y * jax.nn.sigmoid(y)
        h = y.astype(matmul_dtype)
    w, b = params[-1]
    return jnp.dot(h, w.astype(matmul_dtype),
                   preferred_element_type=jnp.float32) + b


if __name__ == "__main__":
    key = jax.random.PRNGKey(0)
    batch, input_dim, n_units, output_dim = 16, 4, 32, 2

    kx, kp = jax.random.split(key)
    x = jax.random.normal(kx, (batch, input_dim), dtype=jnp.float32)
    params = init_params(kp, input_dim, n_units, output_dim)

    # One-time layout prep (hoisted out of the per-step path).
    prepared = prepare_params(params)
    act_dtype = default_activation_dtype()

    out = net_forward(x, prepared, act_dtype=act_dtype)
    out = jax.block_until_ready(out)
    assert out.shape == (batch, output_dim)

    # Check against a reference that mirrors the kernel's math exactly
    # (bf16 MXU operands, f32 accumulate, same elementwise dtype).
    ref_mirror = reference_forward(x, params, matmul_dtype=jnp.bfloat16,
                                   act_dtype=act_dtype)
    tol = 2e-2 if act_dtype == jnp.bfloat16 else 1e-3
    assert jnp.allclose(out, ref_mirror, atol=tol, rtol=tol), (
        float(jnp.max(jnp.abs(out - ref_mirror))))

    # Coarse check against the full-f32 reference (bf16 quantization noise).
    ref_f32 = reference_forward(x, params, matmul_dtype=jnp.float32,
                                act_dtype=jnp.float32)
    assert jnp.allclose(out, ref_f32, atol=7e-2, rtol=7e-2), (
        float(jnp.max(jnp.abs(out - ref_f32))))

    print("KERNEL_OK")
</pallas_src>

<mosaic_0001>
module attributes {stable_mosaic.version = 11 : i64} {
  func.func @_mlp_kernel(%arg0: i32, %arg1: memref<16x4xf32, #tpu.memory_space<vmem>>, %arg2: memref<4x128xbf16, #tpu.memory_space<vmem>>, %arg3: memref<1x128xf32, #tpu.memory_space<vmem>>, %arg4: memref<128x128xbf16, #tpu.memory_space<vmem>>, %arg5: memref<1x128xf32, #tpu.memory_space<vmem>>, %arg6: memref<128x128xbf16, #tpu.memory_space<vmem>>, %arg7: memref<1x128xf32, #tpu.memory_space<vmem>>, %arg8: memref<128x128xbf16, #tpu.memory_space<vmem>>, %arg9: memref<1x128xf32, #tpu.memory_space<vmem>>, %arg10: memref<128x2xbf16, #tpu.memory_space<vmem>>, %arg11: memref<1x2xf32, #tpu.memory_space<vmem>>, %arg12: memref<16x2xf32, #tpu.memory_space<vmem>>) attributes {dimension_semantics = [#tpu.dimension_semantics<parallel>], iteration_bounds = array<i64: 1>, scalar_prefetch = 0 : i64, scratch_operands = 0 : i64, tpu.core_type = #tpu.core_type<tc>, window_params = [{transform_indices = @transform_0, window_bounds = array<i64: 16, 4>}, {pipeline_mode = #tpu.pipeline_mode<synchronous>, transform_indices = @transform_1, window_bounds = array<i64: 4, 128>}, {pipeline_mode = #tpu.pipeline_mode<synchronous>, transform_indices = @transform_2, window_bounds = array<i64: 1, 128>}, {pipeline_mode = #tpu.pipeline_mode<synchronous>, transform_indices = @transform_3, window_bounds = array<i64: 128, 128>}, {pipeline_mode = #tpu.pipeline_mode<synchronous>, transform_indices = @transform_4, window_bounds = array<i64: 1, 128>}, {pipeline_mode = #tpu.pipeline_mode<synchronous>, transform_indices = @transform_5, window_bounds = array<i64: 128, 128>}, {pipeline_mode = #tpu.pipeline_mode<synchronous>, transform_indices = @transform_6, window_bounds = array<i64: 1, 128>}, {pipeline_mode = #tpu.pipeline_mode<synchronous>, transform_indices = @transform_7, window_bounds = array<i64: 128, 128>}, {pipeline_mode = #tpu.pipeline_mode<synchronous>, transform_indices = @transform_8, window_bounds = array<i64: 1, 128>}, {pipeline_mode = #tpu.pipeline_mode<synchronous>, transform_indices = @transform_9, window_bounds = array<i64: 128, 2>}, {pipeline_mode = #tpu.pipeline_mode<synchronous>, transform_indices = @transform_10, window_bounds = array<i64: 1, 2>}, {transform_indices = @transform_11, window_bounds = array<i64: 16, 2>}]} {
    %c0 = arith.constant 0 : index
    %c0_0 = arith.constant 0 : index
    %0 = vector.load %arg1[%c0, %c0_0] : memref<16x4xf32, #tpu.memory_space<vmem>>, vector<16x4xf32>
    %1 = arith.truncf %0 : vector<16x4xf32> to vector<16x4xbf16>
    %c0_1 = arith.constant 0 : index
    %c0_2 = arith.constant 0 : index
    %2 = vector.load %arg2[%c0_1, %c0_2] : memref<4x128xbf16, #tpu.memory_space<vmem>>, vector<4x128xbf16>
    %cst = arith.constant dense<0.000000e+00> : vector<16x128xf32>
    %3 = tpu.matmul %1, %2, %cst {dimension_numbers = #tpu.dot_dimension_numbers<[1], [0], [0], [1], [0, 0, 1, 1], [], []>} : vector<16x4xbf16>, vector<4x128xbf16>, vector<16x128xf32> -> vector<16x128xf32>
    %c0_3 = arith.constant 0 : index
    %c0_4 = arith.constant 0 : index
    %4 = vector.load %arg3[%c0_3, %c0_4] : memref<1x128xf32, #tpu.memory_space<vmem>>, vector<1x128xf32>
    %5 = vector.broadcast %4 : vector<1x128xf32> to vector<16x128xf32>
    %6 = arith.addf %3, %5 : vector<16x128xf32>
    %7 = arith.negf %6 : vector<16x128xf32>
    %8 = math.exp %7 : vector<16x128xf32>
    %cst_5 = arith.constant 1.000000e+00 : f32
    %9 = vector.broadcast %cst_5 : f32 to vector<16x128xf32>
    %10 = arith.addf %9, %8 : vector<16x128xf32>
    %11 = arith.divf %9, %10 : vector<16x128xf32>
    %12 = arith.mulf %6, %11 : vector<16x128xf32>
    %13 = arith.truncf %12 : vector<16x128xf32> to vector<16x128xbf16>
    %c0_6 = arith.constant 0 : index
    %c0_7 = arith.constant 0 : index
    %14 = vector.load %arg4[%c0_6, %c0_7] : memref<128x128xbf16, #tpu.memory_space<vmem>>, vector<128x128xbf16>
    %cst_8 = arith.constant dense<0.000000e+00> : vector<16x128xf32>
    %15 = tpu.matmul %13, %14, %cst_8 {dimension_numbers = #tpu.dot_dimension_numbers<[1], [0], [0], [1], [0, 0, 1, 1], [], []>} : vector<16x128xbf16>, vector<128x128xbf16>, vector<16x128xf32> -> vector<16x128xf32>
    %c0_9 = arith.constant 0 : index
    %c0_10 = arith.constant 0 : index
    %16 = vector.load %arg5[%c0_9, %c0_10] : memref<1x128xf32, #tpu.memory_space<vmem>>, vector<1x128xf32>
    %17 = vector.broadcast %16 : vector<1x128xf32> to vector<16x128xf32>
    %18 = arith.addf %15, %17 : vector<16x128xf32>
    %19 = arith.negf %18 : vector<16x128xf32>
    %20 = math.exp %19 : vector<16x128xf32>
    %cst_11 = arith.constant 1.000000e+00 : f32
    %21 = vector.broadcast %cst_11 : f32 to vector<16x128xf32>
    %22 = arith.addf %21, %20 : vector<16x128xf32>
    %23 = arith.divf %21, %22 : vector<16x128xf32>
    %24 = arith.mulf %18, %23 : vector<16x128xf32>
    %25 = arith.truncf %24 : vector<16x128xf32> to vector<16x128xbf16>
    %c0_12 = arith.constant 0 : index
    %c0_13 = arith.constant 0 : index
    %26 = vector.load %arg6[%c0_12, %c0_13] : memref<128x128xbf16, #tpu.memory_space<vmem>>, vector<128x128xbf16>
    %cst_14 = arith.constant dense<0.000000e+00> : vector<16x128xf32>
    %27 = tpu.matmul %25, %26, %cst_14 {dimension_numbers = #tpu.dot_dimension_numbers<[1], [0], [0], [1], [0, 0, 1, 1], [], []>} : vector<16x128xbf16>, vector<128x128xbf16>, vector<16x128xf32> -> vector<16x128xf32>
    %c0_15 = arith.constant 0 : index
    %c0_16 = arith.constant 0 : index
    %28 = vector.load %arg7[%c0_15, %c0_16] : memref<1x128xf32, #tpu.memory_space<vmem>>, vector<1x128xf32>
    %29 = vector.broadcast %28 : vector<1x128xf32> to vector<16x128xf32>
    %30 = arith.addf %27, %29 : vector<16x128xf32>
    %31 = arith.negf %30 : vector<16x128xf32>
    %32 = math.exp %31 : vector<16x128xf32>
    %cst_17 = arith.constant 1.000000e+00 : f32
    %33 = vector.broadcast %cst_17 : f32 to vector<16x128xf32>
    %34 = arith.addf %33, %32 : vector<16x128xf32>
    %35 = arith.divf %33, %34 : vector<16x128xf32>
    %36 = arith.mulf %30, %35 : vector<16x128xf32>
    %37 = arith.truncf %36 : vector<16x128xf32> to vector<16x128xbf16>
    %c0_18 = arith.constant 0 : index
    %c0_19 = arith.constant 0 : index
    %38 = vector.load %arg8[%c0_18, %c0_19] : memref<128x128xbf16, #tpu.memory_space<vmem>>, vector<128x128xbf16>
    %cst_20 = arith.constant dense<0.000000e+00> : vector<16x128xf32>
    %39 = tpu.matmul %37, %38, %cst_20 {dimension_numbers = #tpu.dot_dimension_numbers<[1], [0], [0], [1], [0, 0, 1, 1], [], []>} : vector<16x128xbf16>, vector<128x128xbf16>, vector<16x128xf32> -> vector<16x128xf32>
    %c0_21 = arith.constant 0 : index
    %c0_22 = arith.constant 0 : index
    %40 = vector.load %arg9[%c0_21, %c0_22] : memref<1x128xf32, #tpu.memory_space<vmem>>, vector<1x128xf32>
    %41 = vector.broadcast %40 : vector<1x128xf32> to vector<16x128xf32>
    %42 = arith.addf %39, %41 : vector<16x128xf32>
    %43 = arith.negf %42 : vector<16x128xf32>
    %44 = math.exp %43 : vector<16x128xf32>
    %cst_23 = arith.constant 1.000000e+00 : f32
    %45 = vector.broadcast %cst_23 : f32 to vector<16x128xf32>
    %46 = arith.addf %45, %44 : vector<16x128xf32>
    %47 = arith.divf %45, %46 : vector<16x128xf32>
    %48 = arith.mulf %42, %47 : vector<16x128xf32>
    %49 = arith.truncf %48 : vector<16x128xf32> to vector<16x128xbf16>
    %c0_24 = arith.constant 0 : index
    %c0_25 = arith.constant 0 : index
    %50 = vector.load %arg10[%c0_24, %c0_25] : memref<128x2xbf16, #tpu.memory_space<vmem>>, vector<128x2xbf16>
    %cst_26 = arith.constant dense<0.000000e+00> : vector<16x2xf32>
    %51 = tpu.matmul %49, %50, %cst_26 {dimension_numbers = #tpu.dot_dimension_numbers<[1], [0], [0], [1], [0, 0, 1, 1], [], []>} : vector<16x128xbf16>, vector<128x2xbf16>, vector<16x2xf32> -> vector<16x2xf32>
    %c0_27 = arith.constant 0 : index
    %c0_28 = arith.constant 0 : index
    %52 = vector.load %arg11[%c0_27, %c0_28] : memref<1x2xf32, #tpu.memory_space<vmem>>, vector<1x2xf32>
    %53 = vector.broadcast %52 : vector<1x2xf32> to vector<16x2xf32>
    %54 = arith.addf %51, %53 : vector<16x2xf32>
    %c0_29 = arith.constant 0 : index
    %c0_30 = arith.constant 0 : index
    %55 = vector.load %arg12[%c0_29, %c0_30] : memref<16x2xf32, #tpu.memory_space<vmem>>, vector<16x2xf32>
    tpu.vector_store %arg12[%c0_29, %c0_30], %54 {strides = array<i32>} : memref<16x2xf32, #tpu.memory_space<vmem>>, vector<16x2xf32>,
    return
  }
  func.func @transform_0(%arg0: i32) -> (i32, i32) {
    %c0_i32 = arith.constant 0 : i32
    %c0_i32_0 = arith.constant 0 : i32
    return %arg0, %c0_i32 : i32, i32
  }
  func.func @transform_1(%arg0: i32) -> (i32, i32) {
    %c0_i32 = arith.constant 0 : i32
    %c0_i32_0 = arith.constant 0 : i32
    %c0_i32_1 = arith.constant 0 : i32
    return %c0_i32, %c0_i32_0 : i32, i32
  }
  func.func @transform_2(%arg0: i32) -> (i32, i32) {
    %c0_i32 = arith.constant 0 : i32
    %c0_i32_0 = arith.constant 0 : i32
    %c0_i32_1 = arith.constant 0 : i32
    return %c0_i32, %c0_i32_0 : i32, i32
  }
  func.func @transform_3(%arg0: i32) -> (i32, i32) {
    %c0_i32 = arith.constant 0 : i32
    %c0_i32_0 = arith.constant 0 : i32
    %c0_i32_1 = arith.constant 0 : i32
    return %c0_i32, %c0_i32_0 : i32, i32
  }
  func.func @transform_4(%arg0: i32) -> (i32, i32) {
    %c0_i32 = arith.constant 0 : i32
    %c0_i32_0 = arith.constant 0 : i32
    %c0_i32_1 = arith.constant 0 : i32
    return %c0_i32, %c0_i32_0 : i32, i32
  }
  func.func @transform_5(%arg0: i32) -> (i32, i32) {
    %c0_i32 = arith.constant 0 : i32
    %c0_i32_0 = arith.constant 0 : i32
    %c0_i32_1 = arith.constant 0 : i32
    return %c0_i32, %c0_i32_0 : i32, i32
  }
  func.func @transform_6(%arg0: i32) -> (i32, i32) {
    %c0_i32 = arith.constant 0 : i32
    %c0_i32_0 = arith.constant 0 : i32
    %c0_i32_1 = arith.constant 0 : i32
    return %c0_i32, %c0_i32_0 : i32, i32
  }
  func.func @transform_7(%arg0: i32) -> (i32, i32) {
    %c0_i32 = arith.constant 0 : i32
    %c0_i32_0 = arith.constant 0 : i32
    %c0_i32_1 = arith.constant 0 : i32
    return %c0_i32, %c0_i32_0 : i32, i32
  }
  func.func @transform_8(%arg0: i32) -> (i32, i32) {
    %c0_i32 = arith.constant 0 : i32
    %c0_i32_0 = arith.constant 0 : i32
    %c0_i32_1 = arith.constant 0 : i32
    return %c0_i32, %c0_i32_0 : i32, i32
  }
  func.func @transform_9(%arg0: i32) -> (i32, i32) {
    %c0_i32 = arith.constant 0 : i32
    %c0_i32_0 = arith.constant 0 : i32
    %c0_i32_1 = arith.constant 0 : i32
    return %c0_i32, %c0_i32_0 : i32, i32
  }
  func.func @transform_10(%arg0: i32) -> (i32, i32) {
    %c0_i32 = arith.constant 0 : i32
    %c0_i32_0 = arith.constant 0 : i32
    %c0_i32_1 = arith.constant 0 : i32
    return %c0_i32, %c0_i32_0 : i32, i32
  }
  func.func @transform_11(%arg0: i32) -> (i32, i32) {
    %c0_i32 = arith.constant 0 : i32
    %c0_i32_0 = arith.constant 0 : i32
    return %arg0, %c0_i32 : i32, i32
  }
}

</mosaic_0001>

<llo_original>
// kernel: tpu_custom_call.1
$region0: #{tpu_custom_call.1}
  #allocation0 [shape = 'u32[]', space=smem, size = 0x4, offset = 0x4, fixed_abs, tag = 'smem constant byte address 0x4 - core index']
  #allocation1 [shape = 'u32[72,128]{1,0:T(1,128)}', space=vmem, size = 0x9000, scoped, tag = 'internal scratch']
  %s0 = inlined_call_operand.vmem [shape: f32[16,4], index: 0, kind: input, shape index: {}]
  %s1 = inlined_call_operand.vmem [shape: bf16[4,128], index: 1, kind: input, shape index: {}]
  %s2 = inlined_call_operand.vmem [shape: f32[1,128], index: 2, kind: input, shape index: {}]
  %s3 = inlined_call_operand.vmem [shape: bf16[128,128], index: 3, kind: input, shape index: {}]
  %s4 = inlined_call_operand.vmem [shape: f32[1,128], index: 4, kind: input, shape index: {}]
  %s5 = inlined_call_operand.hbm [shape: bf16[128,128], index: 5, kind: input, shape index: {}]
  %s6 = inlined_call_operand.vmem [shape: f32[1,128], index: 6, kind: input, shape index: {}]
  %s7 = inlined_call_operand.hbm [shape: bf16[128,128], index: 7, kind: input, shape index: {}]
  %s8 = inlined_call_operand.vmem [shape: f32[1,128], index: 8, kind: input, shape index: {}]
  %s9 = inlined_call_operand.vmem [shape: bf16[128,2], index: 9, kind: input, shape index: {}]
  %s10 = inlined_call_operand.vmem [shape: f32[1,2], index: 10, kind: input, shape index: {}]
  %s11 = inlined_call_operand.vmem [shape: f32[16,2], index: 11, kind: output, shape index: {}]
  %s12 = sld [smem:[#allocation0]]
  $region62: #{tpu_custom_call.1} parent=0
    _
  %s14 = ssub.s32 1, %s12
  %s15 = scalar_select 0, %s14, %s12
  $region1: #{tpu_custom_call.1} parent=0
    #allocation2 [shape = 'u8[32768]{0}', space=vmem, size = 0x8000, scoped, tag = 'input window, operand 5, single buffered']
    #allocation3 [shape = 's32[1]{0}', space=sflag, size = 0x4, scoped, tag = 'scoped memory for tpu_custom_call.1']
    #allocation4 [shape = 'u8[32768]{0}', space=vmem, size = 0x8000, scoped, tag = 'input window, operand 7, single buffered']
    #allocation5 [shape = 's32[1]{0}', space=sflag, size = 0x4, scoped, tag = 'scoped memory for tpu_custom_call.1']
    %16 = vsyncpa [#allocation3], 0
    %17 = vsyncpa [#allocation5], 0
    // Predicated region
    $region2: #{tpu_custom_call.1} parent=1 // pred_check
      _
    $region3: #{tpu_custom_call.1} parent=1 // pred_check_branch
      %19 = sbr.rel (0) target = $region5
    $region4: #{tpu_custom_call.1} parent=1 // pred_region
      _
    $region5: #{tpu_custom_call.1} parent=1 // pred_fallthru
      _
    // Predicated region
    $region6: #{tpu_custom_call.1} parent=1 // pred_check
      _
    $region7: #{tpu_custom_call.1} parent=1 // pred_check_branch
      %21 = sbr.rel (0) target = $region9
    $region8: #{tpu_custom_call.1} parent=1 // pred_region
      _
    $region9: #{tpu_custom_call.1} parent=1 // pred_fallthru
      _
    // Predicated region
    $region10: #{tpu_custom_call.1} parent=1 // pred_check
      _
    $region11: #{tpu_custom_call.1} parent=1 // pred_check_branch
      %23 = sbr.rel (0) target = $region13
    $region12: #{tpu_custom_call.1} parent=1 // pred_region
      _
    $region13: #{tpu_custom_call.1} parent=1 // pred_fallthru
      _
    // Predicated region
    $region14: #{tpu_custom_call.1} parent=1 // pred_check
      _
    $region15: #{tpu_custom_call.1} parent=1 // pred_check_branch
      %25 = sbr.rel (0) target = $region17
    $region16: #{tpu_custom_call.1} parent=1 // pred_region
      _
    $region17: #{tpu_custom_call.1} parent=1 // pred_fallthru
      _
    // Predicated region
    $region18: #{tpu_custom_call.1} parent=1 // pred_check
      _
    $region19: #{tpu_custom_call.1} parent=1 // pred_check_branch
      %27 = sbr.rel (0) target = $region21
    $region20: #{tpu_custom_call.1} parent=1 // pred_region
      _
    $region21: #{tpu_custom_call.1} parent=1 // pred_fallthru
      _
    // Predicated region
    $region22: #{tpu_custom_call.1} parent=1 // pred_check
      _
    $region23: #{tpu_custom_call.1} parent=1 // pred_check_branch
      %29 = sbr.rel (0) target = $region25
    $region24: #{tpu_custom_call.1} parent=1 // pred_region
      %31 = vsyncadd [#allocation3], 0
      %s32 = sshll.u32 %s5, 4
      %s33 = int_to_ptr.hbm [resolvable:$true] %s32
      %s34 = sshll.u32 [#allocation2], 4
      %s35 = int_to_ptr.vmem [resolvable:$true] %s34
      %40 = dma.hbm_to_vmem [thread:$0]  %s33, 1024, %s35, [#allocation3], 64, 64, 4
    $region25: #{tpu_custom_call.1} parent=1 // pred_fallthru
      _
    // Predicated region
    $region26: #{tpu_custom_call.1} parent=1 // pred_check
      _
    $region27: #{tpu_custom_call.1} parent=1 // pred_check_branch
      %42 = sbr.rel (0) target = $region29
    $region28: #{tpu_custom_call.1} parent=1 // pred_region
      _
    $region29: #{tpu_custom_call.1} parent=1 // pred_fallthru
      _
    // Predicated region
    $region30: #{tpu_custom_call.1} parent=1 // pred_check
      _
    $region31: #{tpu_custom_call.1} parent=1 // pred_check_branch
      %44 = sbr.rel (0) target = $region33
    $region32: #{tpu_custom_call.1} parent=1 // pred_region
      %46 = vsyncadd [#allocation5], 0
      %s47 = sshll.u32 %s7, 4
      %s48 = int_to_ptr.hbm [resolvable:$true] %s47
      %s49 = sshll.u32 [#allocation4], 4
      %s50 = int_to_ptr.vmem [resolvable:$true] %s49
      %55 = dma.hbm_to_vmem [thread:$0]  %s48, 1024, %s50, [#allocation5], 64, 64, 4
    $region33: #{tpu_custom_call.1} parent=1 // pred_fallthru
      _
    // Predicated region
    $region34: #{tpu_custom_call.1} parent=1 // pred_check
      _
    $region35: #{tpu_custom_call.1} parent=1 // pred_check_branch
      %57 = sbr.rel (0) target = $region37
    $region36: #{tpu_custom_call.1} parent=1 // pred_region
      _
    $region37: #{tpu_custom_call.1} parent=1 // pred_fallthru
      _
    // Predicated region
    $region38: #{tpu_custom_call.1} parent=1 // pred_check
      _
    $region39: #{tpu_custom_call.1} parent=1 // pred_check_branch
      %59 = sbr.rel (0) target = $region41
    $region40: #{tpu_custom_call.1} parent=1 // pred_region
      _
    $region41: #{tpu_custom_call.1} parent=1 // pred_fallthru
      _
    // Predicated region
    $region42: #{tpu_custom_call.1} parent=1 // pred_check
      _
    $region43: #{tpu_custom_call.1} parent=1 // pred_check_branch
      %61 = sbr.rel (0) target = $region45
    $region44: #{tpu_custom_call.1} parent=1 // pred_region
      _
    $region45: #{tpu_custom_call.1} parent=1 // pred_fallthru
      _
    // Predicated region
    $region46: #{tpu_custom_call.1} parent=1 // pred_check
      _
    $region47: #{tpu_custom_call.1} parent=1 // pred_check_branch
      %63 = sbr.rel (0) target = $region49
    $region48: #{tpu_custom_call.1} parent=1 // pred_region
      %65 = dma.done [#allocation3], 1024
    $region49: #{tpu_custom_call.1} parent=1 // pred_fallthru
      _
    // Predicated region
    $region50: #{tpu_custom_call.1} parent=1 // pred_check
      _
    $region51: #{tpu_custom_call.1} parent=1 // pred_check_branch
      %67 = sbr.rel (0) target = $region53
    $region52: #{tpu_custom_call.1} parent=1 // pred_region
      %69 = dma.done [#allocation5], 1024
    $region53: #{tpu_custom_call.1} parent=1 // pred_fallthru
      _
    %v71 = vld [vmem:[%s0] sm:$0xff]
    %v72 = vld [vmem:[%s0 + $0x8] sm:$0xff]
    %v73 = vpack.c.bf16 %v72, %v71
    %v74 = vld [vmem:[%s1] sm:$0x3]
    %v75 = vld [vmem:[%s2] sm:$0x1]
    %v77 = vperm.slane %v75, 0
    %vm79 = vcmask 31744
    %v81 = vsel %vm79, %v73, 0
    %vm83 = vcmask 1041408
    %v85 = vsel %vm83, %v74, 0
    %87 = vmatpush.bf16.msra.mxu0 0
    %88 = vmatpush.bf16.msra.mxu0 0
    %89 = vmatpush.bf16.msra.mxu0 0
    %90 = vmatpush.bf16.msra.mxu0 0
    %91 = vmatpush.bf16.msra.mxu0 0
    %92 = vmatpush.bf16.msra.mxu0 0
    %93 = vmatpush.bf16.msra.mxu0 0
    %94 = vmatpush.bf16.msra.mxu0 %v85
    %95 = vmatmul.bf16.gmra.mxu0 %v81
    %v96 = vpop.f32.mrf.mxu0
    %v97 = vadd.f32 %v77, %v96
    %v98 = vpop.f32.mrf.mxu0
    %v99 = vadd.f32 %v77, %v98
    %100 = vdwg.mxu0
    %v101 = vxor.u32 %v97, 2147483648
    %v102 = vxor.u32 %v99, 2147483648
    %v103 = vmul.f32 %v101, 1.442695
    %v104 = vpow.pop %v103
    %v105 = vmul.f32 %v102, 1.442695
    %v106 = vpow.pop %v105
    %v107 = vadd.f32 %v104, 1.0
    %v108 = vadd.f32 %v106, 1.0
    %v109 = vrcp.pop %v107
    %v110 = vmul.f32 %v107, %v109
    %v111 = vsub.f32 1.0, %v110
    %v112 = vmul.f32 %v109, %v111
    %v113 = vadd.f32 %v109, %v112
    %vm114 = vweird.f32 %v107
    %vm115 = vweird.f32 %v109
    %vm116 = vmor %vm114, %vm115
    %v117 = vsel %vm116, %v109, %v113
    %v118 = vand.u32 2147483647, %v107
    %vm119 = vcmp.eq.f32.partialorder %v118, 8.507059e+37
    %v120 = vand.u32 %v107, 2147483648
    %v121 = vor.u32 1.1754944e-38, %v120
    %v122 = vsel %vm119, %v121, %v117
    %v123 = vmul.f32 1.0, %v122
    %v124 = vrcp.pop %v108
    %v125 = vmul.f32 %v108, %v124
    %v126 = vsub.f32 1.0, %v125
    %v127 = vmul.f32 %v124, %v126
    %v128 = vadd.f32 %v124, %v127
    %vm129 = vweird.f32 %v108
    %vm130 = vweird.f32 %v124
    %vm131 = vmor %vm129, %vm130
    %v132 = vsel %vm131, %v124, %v128
    %v133 = vand.u32 2147483647, %v108
    %vm134 = vcmp.eq.f32.partialorder %v133, 8.507059e+37
    %v135 = vand.u32 %v108, 2147483648
    %v136 = vor.u32 1.1754944e-38, %v135
    %v137 = vsel %vm134, %v136, %v132
    %v138 = vmul.f32 1.0, %v137
    %v139 = vmul.f32 %v97, %v123
    %v140 = vmul.f32 %v99, %v138
    %v141 = vpack.c.bf16 %v140, %v139
    %v142 = vld [vmem:[%s3] sm:$0xf]
    %v143 = vld [vmem:[%s3 + $0x4] sm:$0xf]
    %v144 = vld [vmem:[%s3 + $0x8] sm:$0xf]
    %v145 = vld [vmem:[%s3 + $0xc] sm:$0xf]
    %v146 = vld [vmem:[%s3 + $0x10] sm:$0xf]
    %v147 = vld [vmem:[%s3 + $0x14] sm:$0xf]
    %v148 = vld [vmem:[%s3 + $0x18] sm:$0xf]
    %v149 = vld [vmem:[%s3 + $0x1c] sm:$0xf]
    %v150 = vld [vmem:[%s3 + $0x20] sm:$0xf]
    %v151 = vld [vmem:[%s3 + $0x24] sm:$0xf]
    %v152 = vld [vmem:[%s3 + $0x28] sm:$0xf]
    %v153 = vld [vmem:[%s3 + $0x2c] sm:$0xf]
    %v154 = vld [vmem:[%s3 + $0x30] sm:$0xf]
    %v155 = vld [vmem:[%s3 + $0x34] sm:$0xf]
    %v156 = vld [vmem:[%s3 + $0x38] sm:$0xf]
    %v157 = vld [vmem:[%s3 + $0x3c] sm:$0xf]
    %v158 = vld [vmem:[%s4] sm:$0x1]
    %v160 = vperm.slane %v158, 0
    %v178 = vunpack.c.l.b16 %v142
    %v179 = vunpack.c.l.b16 %v143
    %v180 = vunpack.c.l.b16 %v144
    %v181 = vunpack.c.l.b16 %v145
    %v182 = vunpack.c.l.b16 %v146
    %v183 = vunpack.c.l.b16 %v147
    %v184 = vunpack.c.l.b16 %v148
    %v185 = vunpack.c.l.b16 %v149
    %v186 = vunpack.c.l.b16 %v150
    %v187 = vunpack.c.l.b16 %v151
    %v188 = vunpack.c.l.b16 %v152
    %v189 = vunpack.c.l.b16 %v153
    %v190 = vunpack.c.l.b16 %v154
    %v191 = vunpack.c.l.b16 %v155
    %v192 = vunpack.c.l.b16 %v156
    %v193 = vunpack.c.l.b16 %v157
    %v194 = vpack.c.b16 %v179, %v178
    %v195 = vpack.c.b16 %v181, %v180
    %v196 = vpack.c.b16 %v183, %v182
    %v197 = vpack.c.b16 %v185, %v184
    %v198 = vpack.c.b16 %v187, %v186
    %v199 = vpack.c.b16 %v189, %v188
    %v200 = vpack.c.b16 %v191, %v190
    %v201 = vpack.c.b16 %v193, %v192
    %210 = vmatpush.bf16.msra.mxu0 %v201
    %211 = vmatpush.bf16.msra.mxu0 %v200
    %212 = vmatpush.bf16.msra.mxu0 %v199
    %213 = vmatpush.bf16.msra.mxu0 %v198
    %214 = vmatpush.bf16.msra.mxu0 %v197
    %215 = vmatpush.bf16.msra.mxu0 %v196
    %216 = vmatpush.bf16.msra.mxu0 %v195
    %217 = vmatpush.bf16.msra.mxu0 %v194
    %218 = vmatmul.bf16.gmra.mxu0 %v141
    %v219 = vpop.f32.mrf.mxu0
    %v220 = vadd.f32 %v160, %v219
    %v221 = vpop.f32.mrf.mxu0
    %v222 = vadd.f32 %v160, %v221
    %223 = vdwg.mxu0
    %v224 = vxor.u32 %v220, 2147483648
    %v225 = vxor.u32 %v222, 2147483648
    %v226 = vmul.f32 %v224, 1.442695
    %v227 = vpow.pop %v226
    %v228 = vmul.f32 %v225, 1.442695
    %v229 = vpow.pop %v228
    %v230 = vadd.f32 %v227, 1.0
    %v231 = vadd.f32 %v229, 1.0
    %v232 = vrcp.pop %v230
    %v233 = vmul.f32 %v230, %v232
    %v234 = vsub.f32 1.0, %v233
    %v235 = vmul.f32 %v232, %v234
    %v236 = vadd.f32 %v232, %v235
    %vm237 = vweird.f32 %v230
    %vm238 = vweird.f32 %v232
    %vm239 = vmor %vm237, %vm238
    %v240 = vsel %vm239, %v232, %v236
    %v241 = vand.u32 2147483647, %v230
    %vm242 = vcmp.eq.f32.partialorder %v241, 8.507059e+37
    %v243 = vand.u32 %v230, 2147483648
    %v244 = vor.u32 1.1754944e-38, %v243
    %v245 = vsel %vm242, %v244, %v240
    %v246 = vmul.f32 1.0, %v245
    %v247 = vrcp.pop %v231
    %v248 = vmul.f32 %v231, %v247
    %v249 = vsub.f32 1.0, %v248
    %v250 = vmul.f32 %v247, %v249
    %v251 = vadd.f32 %v247, %v250
    %vm252 = vweird.f32 %v231
    %vm253 = vweird.f32 %v247
    %vm254 = vmor %vm252, %vm253
    %v255 = vsel %vm254, %v247, %v251
    %v256 = vand.u32 2147483647, %v231
    %vm257 = vcmp.eq.f32.partialorder %v256, 8.507059e+37
    %v258 = vand.u32 %v231, 2147483648
    %v259 = vor.u32 1.1754944e-38, %v258
    %v260 = vsel %vm257, %v259, %v255
    %v261 = vmul.f32 1.0, %v260
    %v262 = vmul.f32 %v220, %v246
    %v263 = vmul.f32 %v222, %v261
    %v264 = vpack.c.bf16 %v263, %v262
    %v265 = vld [vmem:[#allocation2] sm:$0xf]
    %v266 = vld [vmem:[#allocation2 + $0x4] sm:$0xf]
    %v267 = vld [vmem:[#allocation2 + $0x8] sm:$0xf]
    %v268 = vld [vmem:[#allocation2 + $0xc] sm:$0xf]
    %v269 = vld [vmem:[#allocation2 + $0x10] sm:$0xf]
    %v270 = vld [vmem:[#allocation2 + $0x14] sm:$0xf]
    %v271 = vld [vmem:[#allocation2 + $0x18] sm:$0xf]
    %v272 = vld [vmem:[#allocation2 + $0x1c] sm:$0xf]
    %v273 = vld [vmem:[#allocation2 + $0x20] sm:$0xf]
    %v274 = vld [vmem:[#allocation2 + $0x24] sm:$0xf]
    %v275 = vld [vmem:[#allocation2 + $0x28] sm:$0xf]
    %v276 = vld [vmem:[#allocation2 + $0x2c] sm:$0xf]
    %v277 = vld [vmem:[#allocation2 + $0x30] sm:$0xf]
    %v278 = vld [vmem:[#allocation2 + $0x34] sm:$0xf]
    %v279 = vld [vmem:[#allocation2 + $0x38] sm:$0xf]
    %v280 = vld [vmem:[#allocation2 + $0x3c] sm:$0xf]
    %v281 = vld [vmem:[%s6] sm:$0x1]
    %v283 = vperm.slane %v281, 0
    %v301 = vunpack.c.l.b16 %v265
    %v302 = vunpack.c.l.b16 %v266
    %v303 = vunpack.c.l.b16 %v267
    %v304 = vunpack.c.l.b16 %v268
    %v305 = vunpack.c.l.b16 %v269
    %v306 = vunpack.c.l.b16 %v270
    %v307 = vunpack.c.l.b16 %v271
    %v308 = vunpack.c.l.b16 %v272
    %v309 = vunpack.c.l.b16 %v273
    %v310 = vunpack.c.l.b16 %v274
    %v311 = vunpack.c.l.b16 %v275
    %v312 = vunpack.c.l.b16 %v276
    %v313 = vunpack.c.l.b16 %v277
    %v314 = vunpack.c.l.b16 %v278
    %v315 = vunpack.c.l.b16 %v279
    %v316 = vunpack.c.l.b16 %v280
    %v317 = vpack.c.b16 %v302, %v301
    %v318 = vpack.c.b16 %v304, %v303
    %v319 = vpack.c.b16 %v306, %v305
    %v320 = vpack.c.b16 %v308, %v307
    %v321 = vpack.c.b16 %v310, %v309
    %v322 = vpack.c.b16 %v312, %v311
    %v323 = vpack.c.b16 %v314, %v313
    %v324 = vpack.c.b16 %v316, %v315
    %333 = vmatpush.bf16.msra.mxu0 %v324
    %334 = vmatpush.bf16.msra.mxu0 %v323
    %335 = vmatpush.bf16.msra.mxu0 %v322
    %336 = vmatpush.bf16.msra.mxu0 %v321
    %337 = vmatpush.bf16.msra.mxu0 %v320
    %338 = vmatpush.bf16.msra.mxu0 %v319
    %339 = vmatpush.bf16.msra.mxu0 %v318
    %340 = vmatpush.bf16.msra.mxu0 %v317
    %341 = vmatmul.bf16.gmra.mxu0 %v264
    %v342 = vpop.f32.mrf.mxu0
    %v343 = vadd.f32 %v283, %v342
    %v344 = vpop.f32.mrf.mxu0
    %v345 = vadd.f32 %v283, %v344
    %346 = vdwg.mxu0
    %v347 = vxor.u32 %v343, 2147483648
    %v348 = vxor.u32 %v345, 2147483648
    %v349 = vmul.f32 %v347, 1.442695
    %v350 = vpow.pop %v349
    %v351 = vmul.f32 %v348, 1.442695
    %v352 = vpow.pop %v351
    %v353 = vadd.f32 %v350, 1.0
    %v354 = vadd.f32 %v352, 1.0
    %v355 = vrcp.pop %v353
    %v356 = vmul.f32 %v353, %v355
    %v357 = vsub.f32 1.0, %v356
    %v358 = vmul.f32 %v355, %v357
    %v359 = vadd.f32 %v355, %v358
    %vm360 = vweird.f32 %v353
    %vm361 = vweird.f32 %v355
    %vm362 = vmor %vm360, %vm361
    %v363 = vsel %vm362, %v355, %v359
    %v364 = vand.u32 2147483647, %v353
    %vm365 = vcmp.eq.f32.partialorder %v364, 8.507059e+37
    %v366 = vand.u32 %v353, 2147483648
    %v367 = vor.u32 1.1754944e-38, %v366
    %v368 = vsel %vm365, %v367, %v363
    %v369 = vmul.f32 1.0, %v368
    %v370 = vrcp.pop %v354
    %v371 = vmul.f32 %v354, %v370
    %v372 = vsub.f32 1.0, %v371
    %v373 = vmul.f32 %v370, %v372
    %v374 = vadd.f32 %v370, %v373
    %vm375 = vweird.f32 %v354
    %vm376 = vweird.f32 %v370
    %vm377 = vmor %vm375, %vm376
    %v378 = vsel %vm377, %v370, %v374
    %v379 = vand.u32 2147483647, %v354
    %vm380 = vcmp.eq.f32.partialorder %v379, 8.507059e+37
    %v381 = vand.u32 %v354, 2147483648
    %v382 = vor.u32 1.1754944e-38, %v381
    %v383 = vsel %vm380, %v382, %v378
    %v384 = vmul.f32 1.0, %v383
    %v385 = vmul.f32 %v343, %v369
    %v386 = vmul.f32 %v345, %v384
    %v387 = vpack.c.bf16 %v386, %v385
    %v388 = vld [vmem:[#allocation4] sm:$0xf]
    %v389 = vld [vmem:[#allocation4 + $0x4] sm:$0xf]
    %v390 = vld [vmem:[#allocation4 + $0x8] sm:$0xf]
    %v391 = vld [vmem:[#allocation4 + $0xc] sm:$0xf]
    %v392 = vld [vmem:[#allocation4 + $0x10] sm:$0xf]
    %v393 = vld [vmem:[#allocation4 + $0x14] sm:$0xf]
    %v394 = vld [vmem:[#allocation4 + $0x18] sm:$0xf]
    %v395 = vld [vmem:[#allocation4 + $0x1c] sm:$0xf]
    %v396 = vld [vmem:[#allocation4 + $0x20] sm:$0xf]
    %v397 = vld [vmem:[#allocation4 + $0x24] sm:$0xf]
    %v398 = vld [vmem:[#allocation4 + $0x28] sm:$0xf]
    %v399 = vld [vmem:[#allocation4 + $0x2c] sm:$0xf]
    %v400 = vld [vmem:[#allocation4 + $0x30] sm:$0xf]
    %v401 = vld [vmem:[#allocation4 + $0x34] sm:$0xf]
    %v402 = vld [vmem:[#allocation4 + $0x38] sm:$0xf]
    %v403 = vld [vmem:[#allocation4 + $0x3c] sm:$0xf]
    %v404 = vld [vmem:[%s8] sm:$0x1]
    %v406 = vperm.slane %v404, 0
    %v424 = vunpack.c.l.b16 %v388
    %v425 = vunpack.c.l.b16 %v389
    %v426 = vunpack.c.l.b16 %v390
    %v427 = vunpack.c.l.b16 %v391
    %v428 = vunpack.c.l.b16 %v392
    %v429 = vunpack.c.l.b16 %v393
    %v430 = vunpack.c.l.b16 %v394
    %v431 = vunpack.c.l.b16 %v395
    %v432 = vunpack.c.l.b16 %v396
    %v433 = vunpack.c.l.b16 %v397
    %v434 = vunpack.c.l.b16 %v398
    %v435 = vunpack.c.l.b16 %v399
    %v436 = vunpack.c.l.b16 %v400
    %v437 = vunpack.c.l.b16 %v401
    %v438 = vunpack.c.l.b16 %v402
    %v439 = vunpack.c.l.b16 %v403
    %v440 = vpack.c.b16 %v425, %v424
    %v441 = vpack.c.b16 %v427, %v426
    %v442 = vpack.c.b16 %v429, %v428
    %v443 = vpack.c.b16 %v431, %v430
    %v444 = vpack.c.b16 %v433, %v432
    %v445 = vpack.c.b16 %v435, %v434
    %v446 = vpack.c.b16 %v437, %v436
    %v447 = vpack.c.b16 %v439, %v438
    %456 = vmatpush.bf16.msra.mxu0 %v447
    %457 = vmatpush.bf16.msra.mxu0 %v446
    %458 = vmatpush.bf16.msra.mxu0 %v445
    %459 = vmatpush.bf16.msra.mxu0 %v444
    %460 = vmatpush.bf16.msra.mxu0 %v443
    %461 = vmatpush.bf16.msra.mxu0 %v442
    %462 = vmatpush.bf16.msra.mxu0 %v441
    %463 = vmatpush.bf16.msra.mxu0 %v440
    %464 = vmatmul.bf16.gmra.mxu0 %v387
    %v465 = vpop.f32.mrf.mxu0
    %v466 = vadd.f32 %v406, %v465
    %v467 = vpop.f32.mrf.mxu0
    %v468 = vadd.f32 %v406, %v467
    %469 = vdwg.mxu0
    %v470 = vxor.u32 %v466, 2147483648
    %v471 = vxor.u32 %v468, 2147483648
    %v472 = vmul.f32 %v470, 1.442695
    %v473 = vpow.pop %v472
    %v474 = vmul.f32 %v471, 1.442695
    %v475 = vpow.pop %v474
    %v476 = vadd.f32 %v473, 1.0
    %v477 = vadd.f32 %v475, 1.0
    %v478 = vrcp.pop %v476
    %v479 = vmul.f32 %v476, %v478
    %v480 = vsub.f32 1.0, %v479
    %v481 = vmul.f32 %v478, %v480
    %v482 = vadd.f32 %v478, %v481
    %vm483 = vweird.f32 %v476
    %vm484 = vweird.f32 %v478
    %vm485 = vmor %vm483, %vm484
    %v486 = vsel %vm485, %v478, %v482
    %v487 = vand.u32 2147483647, %v476
    %vm488 = vcmp.eq.f32.partialorder %v487, 8.507059e+37
    %v489 = vand.u32 %v476, 2147483648
    %v490 = vor.u32 1.1754944e-38, %v489
    %v491 = vsel %vm488, %v490, %v486
    %v492 = vmul.f32 1.0, %v491
    %v493 = vrcp.pop %v477
    %v494 = vmul.f32 %v477, %v493
    %v495 = vsub.f32 1.0, %v494
    %v496 = vmul.f32 %v493, %v495
    %v497 = vadd.f32 %v493, %v496
    %vm498 = vweird.f32 %v477
    %vm499 = vweird.f32 %v493
    %vm500 = vmor %vm498, %vm499
    %v501 = vsel %vm500, %v493, %v497
    %v502 = vand.u32 2147483647, %v477
    %vm503 = vcmp.eq.f32.partialorder %v502, 8.507059e+37
    %v504 = vand.u32 %v477, 2147483648
    %v505 = vor.u32 1.1754944e-38, %v504
    %v506 = vsel %vm503, %v505, %v501
    %v507 = vmul.f32 1.0, %v506
    %v508 = vmul.f32 %v466, %v492
    %v509 = vmul.f32 %v468, %v507
    %v510 = vpack.c.bf16 %v509, %v508
    %v511 = vld [vmem:[%s9] sm:$0xf]
    %v512 = vld [vmem:[%s9 + $0x4] sm:$0xf]
    %v513 = vld [vmem:[%s9 + $0x8] sm:$0xf]
    %v514 = vld [vmem:[%s9 + $0xc] sm:$0xf]
    %v515 = vld [vmem:[%s9 + $0x10] sm:$0xf]
    %v516 = vld [vmem:[%s9 + $0x14] sm:$0xf]
    %v517 = vld [vmem:[%s9 + $0x18] sm:$0xf]
    %v518 = vld [vmem:[%s9 + $0x1c] sm:$0xf]
    %v519 = vld [vmem:[%s9 + $0x20] sm:$0xf]
    %v520 = vld [vmem:[%s9 + $0x24] sm:$0xf]
    %v521 = vld [vmem:[%s9 + $0x28] sm:$0xf]
    %v522 = vld [vmem:[%s9 + $0x2c] sm:$0xf]
    %v523 = vld [vmem:[%s9 + $0x30] sm:$0xf]
    %v524 = vld [vmem:[%s9 + $0x34] sm:$0xf]
    %v525 = vld [vmem:[%s9 + $0x38] sm:$0xf]
    %v526 = vld [vmem:[%s9 + $0x3c] sm:$0xf]
    %v527 = vld [vmem:[%s10] sm:$0x1]
    %v529 = vperm.slane %v527, 0
    %v547 = vunpack.c.l.b16 %v511
    %v548 = vunpack.c.l.b16 %v512
    %v549 = vunpack.c.l.b16 %v513
    %v550 = vunpack.c.l.b16 %v514
    %v551 = vunpack.c.l.b16 %v515
    %v552 = vunpack.c.l.b16 %v516
    %v553 = vunpack.c.l.b16 %v517
    %v554 = vunpack.c.l.b16 %v518
    %v555 = vunpack.c.l.b16 %v519
    %v556 = vunpack.c.l.b16 %v520
    %v557 = vunpack.c.l.b16 %v521
    %v558 = vunpack.c.l.b16 %v522
    %v559 = vunpack.c.l.b16 %v523
    %v560 = vunpack.c.l.b16 %v524
    %v561 = vunpack.c.l.b16 %v525
    %v562 = vunpack.c.l.b16 %v526
    %v563 = vpack.c.b16 %v548, %v547
    %v564 = vpack.c.b16 %v550, %v549
    %v565 = vpack.c.b16 %v552, %v551
    %v566 = vpack.c.b16 %v554, %v553
    %v567 = vpack.c.b16 %v556, %v555
    %v568 = vpack.c.b16 %v558, %v557
    %v569 = vpack.c.b16 %v560, %v559
    %v570 = vpack.c.b16 %v562, %v561
    %579 = vmatpush.bf16.msra.mxu0 %v570
    %580 = vmatpush.bf16.msra.mxu0 %v569
    %581 = vmatpush.bf16.msra.mxu0 %v568
    %582 = vmatpush.bf16.msra.mxu0 %v567
    %583 = vmatpush.bf16.msra.mxu0 %v566
    %584 = vmatpush.bf16.msra.mxu0 %v565
    %585 = vmatpush.bf16.msra.mxu0 %v564
    %586 = vmatpush.bf16.msra.mxu0 %v563
    %587 = vmatmul.bf16.gmra.mxu0 %v510
    %v588 = vpop.f32.mrf.mxu0
    %v589 = vadd.f32 %v529, %v588
    %v590 = vpop.f32.mrf.mxu0
    %v591 = vadd.f32 %v529, %v590
    %592 = vdwg.mxu0
    %vm593 = vcmask 15360
    %594 = vst.msk [vmem:[%s11] sm:$0xff] %vm593, %v589
    %595 = vst.msk [vmem:[%s11 + $0x8] sm:$0xff] %vm593, %v591
    // Predicated region
    $region54: #{tpu_custom_call.1} parent=1 // pred_check
      _
    $region55: #{tpu_custom_call.1} parent=1 // pred_check_branch
      %597 = sbr.rel (0) target = $region57
    $region56: #{tpu_custom_call.1} parent=1 // pred_region
      _
    $region57: #{tpu_custom_call.1} parent=1 // pred_fallthru
      _
    // Predicated region
    $region58: #{tpu_custom_call.1} parent=1 // pred_check
      _
    $region59: #{tpu_custom_call.1} parent=1 // pred_check_branch
      %599 = sbr.rel (0) target = $region61
    $region60: #{tpu_custom_call.1} parent=1 // pred_region
      _
    $region61: #{tpu_custom_call.1} parent=1 // pred_fallthru
      _
    %600 = vsyncpa [#allocation3], 1
    %601 = vsyncpa [#allocation5], 1

</llo_original>
